<compile_context>
chip_gen: v7x
topology: tpu7x:2x2x1
jax: 0.10.0
libtpu: 0.0.40
codegen_flags: <defaults>
</compile_context>

<pallas_src>
import functools

import jax
import jax.numpy as jnp
from jax.experimental import pallas as pl
from jax.experimental.pallas import tpu as pltpu

INPUT_DIM = 309
HIDDEN_UNITS = 256
DROPOUT_RATE = 0.0031120197133946838   # inference-mode dropout == identity


def _round_up(x, m):
    return (x + m - 1) // m * m


def _mlp_kernel(x_ref, w1_ref, b1_ref, w2_ref, b2_ref, o_ref):
    bt = x_ref.shape[0]
    # fc1 on the MXU: bf16 operands (x cast in-register), f32 accumulation.
    x = x_ref[...].astype(w1_ref.dtype)                        # [bt, 309] bf16
    h = jnp.dot(x, w1_ref[...], preferred_element_type=jnp.float32)
    h = jnp.maximum(h + b1_ref[...], 0.0)                      # bias+ReLU, f32 VPU
    # TODO(synk): training-mode dropout (random mask + 1/(1-p) scaling) is not
    # implemented; inference semantics (identity) match model.eval().
    # fc2 (256 -> 1) as VPU multiply + cross-lane reduce, then emit a
    # lane-dense (1, bt) row (one small XLU relayout) so output stores are
    # unmasked and the HBM writeback is dense.
    y = jnp.sum(h * w2_ref[...], axis=1, keepdims=True) + b2_ref[0]   # [bt, 1]
    o_ref[...] = y.reshape(1, bt)


def prepare_params(w1, b1, w2, b2, compute_dtype=jnp.bfloat16):
    """One-time parameter packing (hoisted out of the per-call jitted path).

    w1: [INPUT_DIM, HIDDEN] (transposed from PyTorch's [out, in] layout),
    b1: [HIDDEN], w2: [HIDDEN, 1], b2: [1].
    """
    w1p = w1.astype(compute_dtype)                  # [K, H]  MXU operand (bf16)
    b1p = b1.astype(jnp.float32).reshape(1, -1)     # [1, H]
    w2p = w2.astype(jnp.float32).reshape(1, -1)     # [1, H]  VPU operand (f32)
    b2p = b2.astype(jnp.float32).reshape(1)         # [1]     SMEM scalar
    return w1p, b1p, w2p, b2p


@functools.partial(jax.jit, static_argnames=("batch_tile",))
def activity_nn_forward(x, w1p, b1p, w2p, b2p, *, batch_tile=2048):
    """x: [B, INPUT_DIM] (any float dtype; bf16 accepted directly with no extra
    HBM pass); packed params from prepare_params().  Returns [B, 1] float32."""
    B, K = x.shape
    H = w1p.shape[1]
    assert K == w1p.shape[0], (K, w1p.shape)
    assert batch_tile % 8 == 0

    # ---- pick the batch tile (all static under jit) -------------------------
    x_in = x
    if B <= 512:
        # Single block; pad at most 7 rows so the only block never exceeds the
        # array (trivial copy at this size).
        bt = _round_up(B, 8)
        if bt != B:
            x_in = jnp.pad(x, ((0, bt - B), (0, 0)))
    elif B <= 2 * batch_tile:
        # Two (nearly) balanced blocks -> v7x megacore splits them evenly
        # across its 2 TensorCores.  Last input block may overhang the array
        # (masked edge block); overhang rows are discarded by [:B] below.
        bt = _round_up(pl.cdiv(B, 2), 8)
    else:
        bt = batch_tile
    Bp = x_in.shape[0]
    nblk = pl.cdiv(Bp, bt)

    flops = 2 * B * K * H + 2 * B * H
    bytes_accessed = (
        x.size * x.dtype.itemsize                 # read x
        + w1p.size * w1p.dtype.itemsize           # read W1
        + (b1p.size + w2p.size + b2p.size) * 4    # small params
        + B * 4                                   # write y
    )

    out = pl.pallas_call(
        _mlp_kernel,
        out_shape=jax.ShapeDtypeStruct((nblk, bt), jnp.float32),
        grid_spec=pltpu.PrefetchScalarGridSpec(
            num_scalar_prefetch=0,
            grid=(nblk,),
            in_specs=[
                pl.BlockSpec((bt, K), lambda i: (i, 0)),            # x tile (K unpadded)
                pl.BlockSpec((K, H), lambda i: (0, 0)),             # W1 (grid-invariant)
                pl.BlockSpec((1, H), lambda i: (0, 0)),             # b1
                pl.BlockSpec((1, H), lambda i: (0, 0)),             # w2 row
                pl.BlockSpec(memory_space=pltpu.MemorySpace.SMEM),  # b2 scalar
            ],
            out_specs=pl.BlockSpec((1, bt), lambda i: (i, 0)),      # lane-dense row
        ),
        compiler_params=pltpu.CompilerParams(
            dimension_semantics=("parallel",),       # batch axis -> both v7x TCs
            vmem_limit_bytes=32 * 1024 * 1024,
        ),
        cost_estimate=pl.CostEstimate(
            flops=flops, transcendentals=0, bytes_accessed=bytes_accessed),
    )(x_in, w1p, b1p, w2p, b2p)

    # Layout plumbing back to the PyTorch (B, 1) column shape (tiny array).
    return out.reshape(-1)[:B].reshape(B, 1)


def init_params(key):
    """Deterministic init matching nn.Linear shapes (Kaiming-uniform-ish).
    PyTorch stores weight as [out, in]; we keep [in, out] for the kernel."""
    k1, k2, k3, k4 = jax.random.split(key, 4)
    bound1 = 1.0 / (INPUT_DIM ** 0.5)
    bound2 = 1.0 / (HIDDEN_UNITS ** 0.5)
    w1 = jax.random.uniform(k1, (INPUT_DIM, HIDDEN_UNITS), jnp.float32,
                            -bound1, bound1)
    b1 = jax.random.uniform(k2, (HIDDEN_UNITS,), jnp.float32, -bound1, bound1)
    w2 = jax.random.uniform(k3, (HIDDEN_UNITS, 1), jnp.float32, -bound2, bound2)
    b2 = jax.random.uniform(k4, (1,), jnp.float32, -bound2, bound2)
    return w1, b1, w2, b2


def _reference_forward_f32(x, w1, b1, w2, b2):
    h = jnp.maximum(x @ w1 + b1, 0.0)
    return h @ w2 + b2


def _reference_forward_matched(x, w1p, b1p, w2p, b2p):
    """Mirrors the kernel's precision choices (bf16 fc1 operands, f32 accum)."""
    h = jnp.dot(x.astype(w1p.dtype), w1p,
                preferred_element_type=jnp.float32) + b1p
    h = jnp.maximum(h, 0.0)
    return jnp.sum(h * w2p, axis=1, keepdims=True) + b2p


if __name__ == "__main__":
    key = jax.random.PRNGKey(0)
    kx, kp = jax.random.split(key)

    w1, b1, w2, b2 = init_params(kp)
    params = prepare_params(w1, b1, w2, b2)   # one-time, outside the hot path

    # Primary small case: single 64-row block, lane-dense (1, 64) output.
    batch = 64
    x = jax.random.normal(kx, (batch, INPUT_DIM), jnp.float32)
    y = jax.block_until_ready(activity_nn_forward(x, *params))
    assert y.shape == (batch, 1), y.shape

    y_matched = _reference_forward_matched(x, *params)
    y_f32 = _reference_forward_f32(x, w1, b1, w2, b2)
    assert jnp.allclose(y, y_matched, atol=2e-3, rtol=2e-3), (
        "mismatch vs precision-matched reference",
        float(jnp.max(jnp.abs(y - y_matched))))
    assert jnp.allclose(y, y_f32, atol=3e-2, rtol=3e-2), (
        "mismatch vs f32 reference (beyond expected bf16 rounding)",
        float(jnp.max(jnp.abs(y - y_f32))))

    # Two balanced blocks (v7x two-TC split) + an overhanging last input block.
    xb = jax.random.normal(jax.random.PRNGKey(1), (600, INPUT_DIM), jnp.float32)
    yb = jax.block_until_ready(activity_nn_forward(xb, *params))
    assert yb.shape == (600, 1), yb.shape
    assert jnp.allclose(yb, _reference_forward_matched(xb, *params),
                        atol=2e-3, rtol=2e-3)

    # Tiny unaligned batch: exercises the single-block clamp + <=7-row pad.
    xs = x[:5]
    ys = jax.block_until_ready(activity_nn_forward(xs, *params))
    assert ys.shape == (5, 1), ys.shape
    assert jnp.allclose(ys, y_matched[:5], atol=2e-3, rtol=2e-3)

    print("KERNEL_OK")
</pallas_src>

<mosaic_0001>
module attributes {stable_mosaic.version = 11 : i64} {
  func.func @_mlp_kernel(%arg0: i32, %arg1: memref<64x309xf32, #tpu.memory_space<vmem>>, %arg2: memref<309x256xbf16, #tpu.memory_space<vmem>>, %arg3: memref<1x256xf32, #tpu.memory_space<vmem>>, %arg4: memref<1x256xf32, #tpu.memory_space<vmem>>, %arg5: memref<1xf32, #tpu.memory_space<smem>>, %arg6: memref<1x64xf32, #tpu.memory_space<vmem>>) attributes {dimension_semantics = [#tpu.dimension_semantics<parallel>], iteration_bounds = array<i64: 1>, scalar_prefetch = 0 : i64, scratch_operands = 0 : i64, tpu.core_type = #tpu.core_type<tc>, window_params = [{transform_indices = @transform_0, window_bounds = array<i64: 64, 309>}, {pipeline_mode = #tpu.pipeline_mode<synchronous>, transform_indices = @transform_1, window_bounds = array<i64: 309, 256>}, {pipeline_mode = #tpu.pipeline_mode<synchronous>, transform_indices = @transform_2, window_bounds = array<i64: 1, 256>}, {pipeline_mode = #tpu.pipeline_mode<synchronous>, transform_indices = @transform_3, window_bounds = array<i64: 1, 256>}, {transform_indices = @transform_4, window_bounds = array<i64: 1>}, {transform_indices = @transform_5, window_bounds = array<i64: 1, 64>}]} {
    %c0 = arith.constant 0 : index
    %c0_0 = arith.constant 0 : index
    %0 = vector.load %arg1[%c0, %c0_0] : memref<64x309xf32, #tpu.memory_space<vmem>>, vector<64x309xf32>
    %1 = arith.truncf %0 : vector<64x309xf32> to vector<64x309xbf16>
    %c0_1 = arith.constant 0 : index
    %c0_2 = arith.constant 0 : index
    %2 = vector.load %arg2[%c0_1, %c0_2] : memref<309x256xbf16, #tpu.memory_space<vmem>>, vector<309x256xbf16>
    %cst = arith.constant dense<0.000000e+00> : vector<64x256xf32>
    %3 = tpu.matmul %1, %2, %cst {dimension_numbers = #tpu.dot_dimension_numbers<[1], [0], [0], [1], [0, 0, 1, 1], [], []>} : vector<64x309xbf16>, vector<309x256xbf16>, vector<64x256xf32> -> vector<64x256xf32>
    %c0_3 = arith.constant 0 : index
    %c0_4 = arith.constant 0 : index
    %4 = vector.load %arg3[%c0_3, %c0_4] : memref<1x256xf32, #tpu.memory_space<vmem>>, vector<1x256xf32>
    %5 = vector.broadcast %4 : vector<1x256xf32> to vector<64x256xf32>
    %6 = arith.addf %3, %5 : vector<64x256xf32>
    %cst_5 = arith.constant 0.000000e+00 : f32
    %7 = vector.broadcast %cst_5 : f32 to vector<64x256xf32>
    %8 = arith.maximumf %6, %7 : vector<64x256xf32>
    %c0_6 = arith.constant 0 : index
    %c0_7 = arith.constant 0 : index
    %9 = vector.load %arg4[%c0_6, %c0_7] : memref<1x256xf32, #tpu.memory_space<vmem>>, vector<1x256xf32>
    %10 = vector.broadcast %9 : vector<1x256xf32> to vector<64x256xf32>
    %11 = arith.mulf %8, %10 : vector<64x256xf32>
    %cst_8 = arith.constant dense<0.000000e+00> : vector<64xf32>
    %12 = vector.multi_reduction <add>, %11, %cst_8 [1] : vector<64x256xf32> to vector<64xf32>
    %13 = vector.shape_cast %12 : vector<64xf32> to vector<64x1xf32>
    %c0_9 = arith.constant 0 : index
    %14 = memref.load %arg5[%c0_9] : memref<1xf32, #tpu.memory_space<smem>>
    %15 = vector.broadcast %14 : f32 to vector<64x1xf32>
    %16 = arith.addf %13, %15 : vector<64x1xf32>
    %17 = vector.shape_cast %16 : vector<64x1xf32> to vector<1x64xf32>
    %c0_10 = arith.constant 0 : index
    %c0_11 = arith.constant 0 : index
    %18 = vector.load %arg6[%c0_10, %c0_11] : memref<1x64xf32, #tpu.memory_space<vmem>>, vector<1x64xf32>
    tpu.vector_store %arg6[%c0_10, %c0_11], %17 {strides = array<i32>} : memref<1x64xf32, #tpu.memory_space<vmem>>, vector<1x64xf32>,
    return
  }
  func.func @transform_0(%arg0: i32) -> (i32, i32) {
    %c0_i32 = arith.constant 0 : i32
    %c0_i32_0 = arith.constant 0 : i32
    return %arg0, %c0_i32 : i32, i32
  }
  func.func @transform_1(%arg0: i32) -> (i32, i32) {
    %c0_i32 = arith.constant 0 : i32
    %c0_i32_0 = arith.constant 0 : i32
    %c0_i32_1 = arith.constant 0 : i32
    return %c0_i32, %c0_i32_0 : i32, i32
  }
  func.func @transform_2(%arg0: i32) -> (i32, i32) {
    %c0_i32 = arith.constant 0 : i32
    %c0_i32_0 = arith.constant 0 : i32
    %c0_i32_1 = arith.constant 0 : i32
    return %c0_i32, %c0_i32_0 : i32, i32
  }
  func.func @transform_3(%arg0: i32) -> (i32, i32) {
    %c0_i32 = arith.constant 0 : i32
    %c0_i32_0 = arith.constant 0 : i32
    %c0_i32_1 = arith.constant 0 : i32
    return %c0_i32, %c0_i32_0 : i32, i32
  }
  func.func @transform_4(%arg0: i32) -> i32 {
    %c0_i32 = arith.constant 0 : i32
    %c0_i32_0 = arith.constant 0 : i32
    return %c0_i32 : i32
  }
  func.func @transform_5(%arg0: i32) -> (i32, i32) {
    %c0_i32 = arith.constant 0 : i32
    %c0_i32_0 = arith.constant 0 : i32
    return %arg0, %c0_i32 : i32, i32
  }
}

</mosaic_0001>

<llo_original>
// kernel: activity_nn_forward.1
$region0: #{activity_nn_forward.1}
  #allocation0 [shape = 'u32[]', space=smem, size = 0x4, offset = 0x4, fixed_abs, tag = 'smem constant byte address 0x4 - core index']
  #allocation1 [shape = 'u32[144,128]{1,0:T(1,128)}', space=vmem, size = 0x12000, scoped, tag = 'internal scratch']
  #allocation2 [shape = 'f32[1]{0:T(128)S(6)}', space=smem, size = 0x200, scoped, tag = 'scoped memory for activity_nn_forward.1']
  %s0 = inlined_call_operand.hbm [shape: f32[64,309], index: 0, kind: input, shape index: {}]
  %s1 = inlined_call_operand.hbm [shape: bf16[309,256], index: 1, kind: input, shape index: {}]
  %s2 = inlined_call_operand.vmem [shape: f32[1,256], index: 2, kind: input, shape index: {}]
  %s3 = inlined_call_operand.vmem [shape: f32[1,256], index: 3, kind: input, shape index: {}]
  %s4 = inlined_call_operand.<no memory space> [shape: f32[1], index: 4, kind: input, shape index: {}]
  %s5 = inlined_call_operand.hbm [shape: f32[1,64], index: 5, kind: output, shape index: {}]
  %s6 = sld [smem:[#allocation0]]
  $region38: #{activity_nn_forward.1} parent=0
    _
  %s8 = ssub.s32 1, %s6
  %s9 = scalar_select 0, %s8, %s6
  %10 = sst [smem:[#allocation2]] %s4
  $region1: #{activity_nn_forward.1} parent=0
    #allocation3 [shape = 'u8[98304]{0}', space=vmem, size = 0x18000, scoped, tag = 'input window, operand 0, single buffered']
    #allocation4 [shape = 's32[1]{0}', space=sflag, size = 0x4, scoped, tag = 'scoped memory for activity_nn_forward.1']
    #allocation5 [shape = 's32[1]{0}', space=sflag, size = 0x4, scoped, tag = 'scoped memory for activity_nn_forward.1']
    #allocation6 [shape = 'u8[159744]{0}', space=vmem, size = 0x27000, scoped, tag = 'input window, operand 1, single buffered']
    #allocation7 [shape = 's32[1]{0}', space=sflag, size = 0x4, scoped, tag = 'scoped memory for activity_nn_forward.1']
    #allocation8 [shape = 'u8[512]{0}', space=vmem, size = 0x400, scoped, tag = 'output window, operand 0, single buffered']
    %11 = vsyncpa [#allocation4], 0
    %12 = vsyncpa [#allocation7], 0
    %13 = vsyncpa [#allocation5], 0
    // Predicated region
    $region2: #{activity_nn_forward.1} parent=1 // pred_check
      _
    $region3: #{activity_nn_forward.1} parent=1 // pred_check_branch
      %15 = sbr.rel (0) target = $region5
    $region4: #{activity_nn_forward.1} parent=1 // pred_region
      %s17 = ssub.s32 3072, 3072
      %18 = vsyncadd [#allocation4], %s17
      %s19 = sshll.u32 [#allocation3], 4
      %s20 = int_to_ptr.vmem [resolvable:$true] %s19
      %25 = dma.hbm_to_vmem [thread:$0]  %s0, 3072, %s20, [#allocation4], 384, 384, 24
    $region5: #{activity_nn_forward.1} parent=1 // pred_fallthru
      _
    // Predicated region
    $region6: #{activity_nn_forward.1} parent=1 // pred_check
      _
    $region7: #{activity_nn_forward.1} parent=1 // pred_check_branch
      %27 = sbr.rel (0) target = $region9
    $region8: #{activity_nn_forward.1} parent=1 // pred_region
      %s29 = ssub.s32 4992, 4992
      %30 = vsyncadd [#allocation7], %s29
      %s31 = sshll.u32 [#allocation6], 4
      %s32 = int_to_ptr.vmem [resolvable:$true] %s31
      %37 = dma.hbm_to_vmem [thread:$0]  %s1, 4992, %s32, [#allocation7], 128, 128, 8
    $region9: #{activity_nn_forward.1} parent=1 // pred_fallthru
      _
    // Predicated region
    $region10: #{activity_nn_forward.1} parent=1 // pred_check
      _
    $region11: #{activity_nn_forward.1} parent=1 // pred_check_branch
      %39 = sbr.rel (0) target = $region13
    $region12: #{activity_nn_forward.1} parent=1 // pred_region
      _
    $region13: #{activity_nn_forward.1} parent=1 // pred_fallthru
      _
    // Predicated region
    $region14: #{activity_nn_forward.1} parent=1 // pred_check
      _
    $region15: #{activity_nn_forward.1} parent=1 // pred_check_branch
      %41 = sbr.rel (0) target = $region17
    $region16: #{activity_nn_forward.1} parent=1 // pred_region
      _
    $region17: #{activity_nn_forward.1} parent=1 // pred_fallthru
      _
    // Predicated region
    $region18: #{activity_nn_forward.1} parent=1 // pred_check
      _
    $region19: #{activity_nn_forward.1} parent=1 // pred_check_branch
      %43 = sbr.rel (0) target = $region21
    $region20: #{activity_nn_forward.1} parent=1 // pred_region
      _
    $region21: #{activity_nn_forward.1} parent=1 // pred_fallthru
      _
    // Predicated region
    $region22: #{activity_nn_forward.1} parent=1 // pred_check
      _
    $region23: #{activity_nn_forward.1} parent=1 // pred_check_branch
      %45 = sbr.rel (0) target = $region25
    $region24: #{activity_nn_forward.1} parent=1 // pred_region
      %46 = dma.done [#allocation4], 3072
    $region25: #{activity_nn_forward.1} parent=1 // pred_fallthru
      _
    // Predicated region
    $region26: #{activity_nn_forward.1} parent=1 // pred_check
      _
    $region27: #{activity_nn_forward.1} parent=1 // pred_check_branch
      %48 = sbr.rel (0) target = $region29
    $region28: #{activity_nn_forward.1} parent=1 // pred_region
      %49 = dma.done [#allocation7], 4992
    $region29: #{activity_nn_forward.1} parent=1 // pred_fallthru
      _
    %v51 = vld [vmem:[#allocation3] sm:$0xff]
    %v52 = vld [vmem:[#allocation3 + $0x8] sm:$0xff]
    %v53 = vld [vmem:[#allocation3 + $0x10] sm:$0xff]
    %v54 = vld [vmem:[#allocation3 + $0x18] sm:$0xff]
    %v55 = vld [vmem:[#allocation3 + $0x20] sm:$0xff]
    %v56 = vld [vmem:[#allocation3 + $0x28] sm:$0xff]
    %v57 = vld [vmem:[#allocation3 + $0x30] sm:$0xff]
    %v58 = vld [vmem:[#allocation3 + $0x38] sm:$0xff]
    %v59 = vld [vmem:[#allocation3 + $0x40] sm:$0xff]
    %v60 = vld [vmem:[#allocation3 + $0x48] sm:$0xff]
    %v61 = vld [vmem:[#allocation3 + $0x50] sm:$0xff]
    %v62 = vld [vmem:[#allocation3 + $0x58] sm:$0xff]
    %v63 = vld [vmem:[#allocation3 + $0x60] sm:$0xff]
    %v64 = vld [vmem:[#allocation3 + $0x68] sm:$0xff]
    %v65 = vld [vmem:[#allocation3 + $0x70] sm:$0xff]
    %v66 = vld [vmem:[#allocation3 + $0x78] sm:$0xff]
    %v67 = vld [vmem:[#allocation3 + $0x80] sm:$0xff]
    %v68 = vld [vmem:[#allocation3 + $0x88] sm:$0xff]
    %v69 = vld [vmem:[#allocation3 + $0x90] sm:$0xff]
    %v70 = vld [vmem:[#allocation3 + $0x98] sm:$0xff]
    %v71 = vld [vmem:[#allocation3 + $0xa0] sm:$0xff]
    %v72 = vld [vmem:[#allocation3 + $0xa8] sm:$0xff]
    %v73 = vld [vmem:[#allocation3 + $0xb0] sm:$0xff]
    %v74 = vld [vmem:[#allocation3 + $0xb8] sm:$0xff]
    %v75 = vpack.c.bf16 %v54, %v51
    %v76 = vpack.c.bf16 %v55, %v52
    %v77 = vpack.c.bf16 %v56, %v53
    %v78 = vpack.c.bf16 %v60, %v57
    %v79 = vpack.c.bf16 %v61, %v58
    %v80 = vpack.c.bf16 %v62, %v59
    %v81 = vpack.c.bf16 %v66, %v63
    %v82 = vpack.c.bf16 %v67, %v64
    %v83 = vpack.c.bf16 %v68, %v65
    %v84 = vpack.c.bf16 %v72, %v69
    %v85 = vpack.c.bf16 %v73, %v70
    %v86 = vpack.c.bf16 %v74, %v71
    %v87 = vld [vmem:[#allocation6] sm:$0xff]
    %v88 = vld [vmem:[#allocation6 + $0x8] sm:$0xff]
    %v89 = vld [vmem:[#allocation6 + $0x10] sm:$0xff]
    %v90 = vld [vmem:[#allocation6 + $0x18] sm:$0xff]
    %v91 = vld [vmem:[#allocation6 + $0x20] sm:$0xff]
    %v92 = vld [vmem:[#allocation6 + $0x28] sm:$0xff]
    %v93 = vld [vmem:[#allocation6 + $0x30] sm:$0xff]
    %v94 = vld [vmem:[#allocation6 + $0x38] sm:$0xff]
    %v95 = vld [vmem:[#allocation6 + $0x40] sm:$0xff]
    %v96 = vld [vmem:[#allocation6 + $0x48] sm:$0xff]
    %v97 = vld [vmem:[#allocation6 + $0x50] sm:$0xff]
    %v98 = vld [vmem:[#allocation6 + $0x58] sm:$0xff]
    %v99 = vld [vmem:[#allocation6 + $0x60] sm:$0xff]
    %v100 = vld [vmem:[#allocation6 + $0x68] sm:$0xff]
    %v101 = vld [vmem:[#allocation6 + $0x70] sm:$0xff]
    %v102 = vld [vmem:[#allocation6 + $0x78] sm:$0xff]
    %v103 = vld [vmem:[#allocation6 + $0x80] sm:$0xff]
    %v104 = vld [vmem:[#allocation6 + $0x88] sm:$0xff]
    %v105 = vld [vmem:[#allocation6 + $0x90] sm:$0xff]
    %v106 = vld [vmem:[#allocation6 + $0x98] sm:$0xff]
    %v107 = vld [vmem:[#allocation6 + $0xa0] sm:$0xff]
    %v108 = vld [vmem:[#allocation6 + $0xa8] sm:$0xff]
    %v109 = vld [vmem:[#allocation6 + $0xb0] sm:$0xff]
    %v110 = vld [vmem:[#allocation6 + $0xb8] sm:$0xff]
    %v111 = vld [vmem:[#allocation6 + $0xc0] sm:$0xff]
    %v112 = vld [vmem:[#allocation6 + $0xc8] sm:$0xff]
    %v113 = vld [vmem:[#allocation6 + $0xd0] sm:$0xff]
    %v114 = vld [vmem:[#allocation6 + $0xd8] sm:$0xff]
    %v115 = vld [vmem:[#allocation6 + $0xe0] sm:$0xff]
    %v116 = vld [vmem:[#allocation6 + $0xe8] sm:$0xff]
    %v117 = vld [vmem:[#allocation6 + $0xf0] sm:$0xff]
    %v118 = vld [vmem:[#allocation6 + $0xf8] sm:$0xff]
    %v119 = vld [vmem:[#allocation6 + $0x100] sm:$0xff]
    %v120 = vld [vmem:[#allocation6 + $0x108] sm:$0xff]
    %v121 = vld [vmem:[#allocation6 + $0x110] sm:$0xff]
    %v122 = vld [vmem:[#allocation6 + $0x118] sm:$0xff]
    %v123 = vld [vmem:[#allocation6 + $0x120] sm:$0xff]
    %v124 = vld [vmem:[#allocation6 + $0x128] sm:$0xff]
    %v125 = vld [vmem:[#allocation6 + $0x130] sm:$0x77]
    %v126 = vld [vmem:[%s2] sm:$0x3]
    %v128 = vlaneseq
    %v129 = vshrl.u32 %v128, 7
    %v130 = vsub.s32 0, %v129
    %v131 = vrot.slane %v126, %v130
    %v132 = vlaneseq
    %v133 = vshrl.u32 %v132, 7
    %v134 = vsub.s32 1, %v133
    %v135 = vrot.slane %v126, %v134
    %v177 = vunpack.c.l.b16 %v87
    %v178 = vunpack.c.h.b16 %v87
    %v179 = vunpack.c.l.b16 %v88
    %v180 = vunpack.c.h.b16 %v88
    %v181 = vunpack.c.l.b16 %v89
    %v182 = vunpack.c.h.b16 %v89
    %v183 = vunpack.c.l.b16 %v90
    %v184 = vunpack.c.h.b16 %v90
    %v185 = vunpack.c.l.b16 %v91
    %v186 = vunpack.c.h.b16 %v91
    %v187 = vunpack.c.l.b16 %v92
    %v188 = vunpack.c.h.b16 %v92
    %v189 = vunpack.c.l.b16 %v93
    %v190 = vunpack.c.h.b16 %v93
    %v191 = vunpack.c.l.b16 %v94
    %v192 = vunpack.c.h.b16 %v94
    %v193 = vunpack.c.l.b16 %v95
    %v194 = vunpack.c.h.b16 %v95
    %v195 = vunpack.c.l.b16 %v96
    %v196 = vunpack.c.h.b16 %v96
    %v197 = vunpack.c.l.b16 %v97
    %v198 = vunpack.c.h.b16 %v97
    %v199 = vunpack.c.l.b16 %v98
    %v200 = vunpack.c.h.b16 %v98
    %v201 = vunpack.c.l.b16 %v99
    %v202 = vunpack.c.h.b16 %v99
    %v203 = vunpack.c.l.b16 %v100
    %v204 = vunpack.c.h.b16 %v100
    %v205 = vunpack.c.l.b16 %v101
    %v206 = vunpack.c.h.b16 %v101
    %v207 = vunpack.c.l.b16 %v102
    %v208 = vunpack.c.h.b16 %v102
    %v209 = vunpack.c.l.b16 %v103
    %v210 = vunpack.c.h.b16 %v103
    %v211 = vunpack.c.l.b16 %v104
    %v212 = vunpack.c.h.b16 %v104
    %v213 = vunpack.c.l.b16 %v105
    %v214 = vunpack.c.h.b16 %v105
    %v215 = vunpack.c.l.b16 %v106
    %v216 = vunpack.c.h.b16 %v106
    %v217 = vunpack.c.l.b16 %v107
    %v218 = vunpack.c.h.b16 %v107
    %v219 = vunpack.c.l.b16 %v108
    %v220 = vunpack.c.h.b16 %v108
    %v221 = vunpack.c.l.b16 %v109
    %v222 = vunpack.c.h.b16 %v109
    %v223 = vunpack.c.l.b16 %v110
    %v224 = vunpack.c.h.b16 %v110
    %v225 = vunpack.c.l.b16 %v111
    %v226 = vunpack.c.h.b16 %v111
    %v227 = vunpack.c.l.b16 %v112
    %v228 = vunpack.c.h.b16 %v112
    %v229 = vunpack.c.l.b16 %v113
    %v230 = vunpack.c.h.b16 %v113
    %v231 = vunpack.c.l.b16 %v114
    %v232 = vunpack.c.h.b16 %v114
    %v233 = vunpack.c.l.b16 %v115
    %v234 = vunpack.c.h.b16 %v115
    %v235 = vunpack.c.l.b16 %v116
    %v236 = vunpack.c.h.b16 %v116
    %v237 = vunpack.c.l.b16 %v117
    %v238 = vunpack.c.h.b16 %v117
    %v239 = vunpack.c.l.b16 %v118
    %v240 = vunpack.c.h.b16 %v118
    %v241 = vunpack.c.l.b16 %v119
    %v242 = vunpack.c.h.b16 %v119
    %v243 = vunpack.c.l.b16 %v120
    %v244 = vunpack.c.h.b16 %v120
    %v245 = vunpack.c.l.b16 %v121
    %v246 = vunpack.c.h.b16 %v121
    %v247 = vunpack.c.l.b16 %v122
    %v248 = vunpack.c.h.b16 %v122
    %v249 = vunpack.c.l.b16 %v123
    %v250 = vunpack.c.h.b16 %v123
    %v251 = vunpack.c.l.b16 %v124
    %v252 = vunpack.c.h.b16 %v124
    %v253 = vunpack.c.l.b16 %v125
    %v254 = vunpack.c.h.b16 %v125
    %v255 = vpack.c.b16 %v179, %v177
    %v256 = vpack.c.b16 %v180, %v178
    %v257 = vpack.c.b16 %v183, %v181
    %v258 = vpack.c.b16 %v184, %v182
    %v259 = vpack.c.b16 %v187, %v185
    %v260 = vpack.c.b16 %v188, %v186
    %v261 = vpack.c.b16 %v191, %v189
    %v262 = vpack.c.b16 %v192, %v190
    %v263 = vpack.c.b16 %v195, %v193
    %v264 = vpack.c.b16 %v196, %v194
    %v265 = vpack.c.b16 %v199, %v197
    %v266 = vpack.c.b16 %v200, %v198
    %v267 = vpack.c.b16 %v203, %v201
    %v268 = vpack.c.b16 %v204, %v202
    %v269 = vpack.c.b16 %v207, %v205
    %v270 = vpack.c.b16 %v208, %v206
    %v271 = vpack.c.b16 %v211, %v209
    %v272 = vpack.c.b16 %v212, %v210
    %v273 = vpack.c.b16 %v215, %v213
    %v274 = vpack.c.b16 %v216, %v214
    %v275 = vpack.c.b16 %v219, %v217
    %v276 = vpack.c.b16 %v220, %v218
    %v277 = vpack.c.b16 %v223, %v221
    %v278 = vpack.c.b16 %v224, %v222
    %v279 = vpack.c.b16 %v227, %v225
    %v280 = vpack.c.b16 %v228, %v226
    %v281 = vpack.c.b16 %v231, %v229
    %v282 = vpack.c.b16 %v232, %v230
    %v283 = vpack.c.b16 %v235, %v233
    %v284 = vpack.c.b16 %v236, %v234
    %v285 = vpack.c.b16 %v239, %v237
    %v286 = vpack.c.b16 %v240, %v238
    %v287 = vpack.c.b16 %v243, %v241
    %v288 = vpack.c.b16 %v244, %v242
    %v289 = vpack.c.b16 %v247, %v245
    %v290 = vpack.c.b16 %v248, %v246
    %v291 = vpack.c.b16 %v251, %v249
    %v292 = vpack.c.b16 %v252, %v250
    %v293 = vpack.c.b16 %v253, %v253
    %v294 = vpack.c.b16 %v254, %v254
    %vm333 = vcmask 433152
    %v335 = vsel %vm333, %v77, 0
    %v338 = vsel %vm333, %v80, 0
    %v341 = vsel %vm333, %v83, 0
    %v344 = vsel %vm333, %v86, 0
    %vm346 = vcmask 1041408
    %vm347 = vcmask 1042432
    %v348 = vsel %vm346, 4294967295, 65535
    %v349 = vsel %vm347, %v348, 0
    %v351 = vand.u32 %v293, %v349
    %v354 = vand.u32 %v294, %v349
    %356 = vmatprep.subr.bf16.mxu0 %v256
    %357 = vmatpush1.bf16.msra.mxu0 %v255
    %358 = vmatprep.subr.bf16.mxu0 %v258
    %359 = vmatpush1.bf16.msra.mxu0 %v257
    %360 = vmatprep.subr.bf16.mxu0 %v260
    %361 = vmatpush1.bf16.msra.mxu0 %v259
    %362 = vmatprep.subr.bf16.mxu0 %v262
    %363 = vmatpush1.bf16.msra.mxu0 %v261
    %364 = vmatprep.subr.bf16.mxu0 %v264
    %365 = vmatpush1.bf16.msra.mxu0 %v263
    %366 = vmatprep.subr.bf16.mxu0 %v266
    %367 = vmatpush1.bf16.msra.mxu0 %v265
    %368 = vmatprep.subr.bf16.mxu0 %v268
    %369 = vmatpush1.bf16.msra.mxu0 %v267
    %370 = vmatprep.subr.bf16.mxu0 %v270
    %371 = vmatpush1.bf16.msra.mxu0 %v269
    %372 = vmatprep.subr.bf16.mxu0 %v272
    %373 = vmatpush1.bf16.msra.mxu0 %v271
    %374 = vmatprep.subr.bf16.mxu0 %v274
    %375 = vmatpush1.bf16.msra.mxu0 %v273
    %376 = vmatprep.subr.bf16.mxu0 %v276
    %377 = vmatpush1.bf16.msra.mxu0 %v275
    %378 = vmatprep.subr.bf16.mxu0 %v278
    %379 = vmatpush1.bf16.msra.mxu0 %v277
    %380 = vmatprep.subr.bf16.mxu0 %v280
    %381 = vmatpush1.bf16.msra.mxu0 %v279
    %382 = vmatprep.subr.bf16.mxu0 %v282
    %383 = vmatpush1.bf16.msra.mxu0 %v281
    %384 = vmatprep.subr.bf16.mxu0 %v284
    %385 = vmatpush1.bf16.msra.mxu0 %v283
    %386 = vmatprep.subr.bf16.mxu0 %v286
    %387 = vmatpush1.bf16.msra.mxu0 %v285
    %388 = vmatprep.mubr.bf16.mxu0 %v76
    %389 = vmatmul.mubr.bf16.gmra.mrb[0].mxu0 %v75
    %v390 = vpop.f32.mrb[0].mxu0
    %v391 = vadd.f32 %v131, %v390
    %v392 = vpop.f32.mrb[0].mxu0
    %v393 = vadd.f32 %v135, %v392
    %v394 = vpop.f32.mrb[0].mxu0
    %v395 = vadd.f32 %v131, %v394
    %v396 = vpop.f32.mrb[0].mxu0
    %v397 = vadd.f32 %v135, %v396
    %398 = vmatprep.mubr.bf16.mxu0 %v79
    %399 = vmatmul.mubr.bf16.gmra.mrb[0].mxu0 %v78
    %v400 = vpop.f32.mrb[0].mxu0
    %v401 = vadd.f32 %v131, %v400
    %v402 = vpop.f32.mrb[0].mxu0
    %v403 = vadd.f32 %v135, %v402
    %v404 = vpop.f32.mrb[0].mxu0
    %v405 = vadd.f32 %v131, %v404
    %v406 = vpop.f32.mrb[0].mxu0
    %v407 = vadd.f32 %v135, %v406
    %408 = vmatprep.mubr.bf16.mxu0 %v82
    %409 = vmatmul.mubr.bf16.gmra.mrb[0].mxu0 %v81
    %v410 = vpop.f32.mrb[0].mxu0
    %v411 = vadd.f32 %v131, %v410
    %v412 = vpop.f32.mrb[0].mxu0
    %v413 = vadd.f32 %v135, %v412
    %v414 = vpop.f32.mrb[0].mxu0
    %v415 = vadd.f32 %v131, %v414
    %v416 = vpop.f32.mrb[0].mxu0
    %v417 = vadd.f32 %v135, %v416
    %418 = vmatprep.mubr.bf16.mxu0 %v85
    %419 = vmatmul.mubr.bf16.gmra.mrb[0].mxu0 %v84
    %v420 = vpop.f32.mrb[0].mxu0
    %v421 = vadd.f32 %v131, %v420
    %v422 = vpop.f32.mrb[0].mxu0
    %v423 = vadd.f32 %v135, %v422
    %v424 = vpop.f32.mrb[0].mxu0
    %v425 = vadd.f32 %v131, %v424
    %v426 = vpop.f32.mrb[0].mxu0
    %v427 = vadd.f32 %v135, %v426
    %428 = vdwg.mxu0
    %429 = vmatprep.subr.bf16.mxu0 %v288
    %430 = vmatpush1.bf16.msra.mxu0 %v287
    %431 = vmatprep.subr.bf16.mxu0 %v290
    %432 = vmatpush1.bf16.msra.mxu0 %v289
    %433 = vmatprep.subr.bf16.mxu0 %v292
    %434 = vmatpush1.bf16.msra.mxu0 %v291
    %435 = vmatprep.subr.bf16.mxu0 %v354
    %436 = vmatpush1.bf16.msra.mxu0 %v351
    %437 = vmatprep.subr.bf16.mxu0 0
    %438 = vmatpush1.bf16.msra.mxu0 0
    %439 = vmatprep.subr.bf16.mxu0 0
    %440 = vmatpush1.bf16.msra.mxu0 0
    %441 = vmatprep.subr.bf16.mxu0 0
    %442 = vmatpush1.bf16.msra.mxu0 0
    %443 = vmatprep.subr.bf16.mxu0 0
    %444 = vmatpush1.bf16.msra.mxu0 0
    %445 = vmatprep.subr.bf16.mxu0 0
    %446 = vmatpush1.bf16.msra.mxu0 0
    %447 = vmatprep.subr.bf16.mxu0 0
    %448 = vmatpush1.bf16.msra.mxu0 0
    %449 = vmatprep.subr.bf16.mxu0 0
    %450 = vmatpush1.bf16.msra.mxu0 0
    %451 = vmatprep.subr.bf16.mxu0 0
    %452 = vmatpush1.bf16.msra.mxu0 0
    %453 = vmatprep.subr.bf16.mxu0 0
    %454 = vmatpush1.bf16.msra.mxu0 0
    %455 = vmatprep.subr.bf16.mxu0 0
    %456 = vmatpush1.bf16.msra.mxu0 0
    %457 = vmatprep.subr.bf16.mxu0 0
    %458 = vmatpush1.bf16.msra.mxu0 0
    %459 = vmatprep.subr.bf16.mxu0 0
    %460 = vmatpush1.bf16.msra.mxu0 0
    %461 = vmatprep.mubr.bf16.mxu0 0
    %462 = vmatmul.mubr.bf16.gmra.mrb[0].mxu0 %v335
    %v463 = vpop.f32.mrb[0].mxu0
    %v464 = vadd.f32 %v391, %v463
    %v465 = vpop.f32.mrb[0].mxu0
    %v466 = vadd.f32 %v393, %v465
    %v467 = vpop.f32.mrb[0].mxu0
    %v468 = vadd.f32 %v395, %v467
    %v469 = vpop.f32.mrb[0].mxu0
    %v470 = vadd.f32 %v397, %v469
    %471 = vmatprep.mubr.bf16.mxu0 0
    %472 = vmatmul.mubr.bf16.gmra.mrb[0].mxu0 %v338
    %v473 = vpop.f32.mrb[0].mxu0
    %v474 = vadd.f32 %v401, %v473
    %v475 = vpop.f32.mrb[0].mxu0
    %v476 = vadd.f32 %v403, %v475
    %v477 = vpop.f32.mrb[0].mxu0
    %v478 = vadd.f32 %v405, %v477
    %v479 = vpop.f32.mrb[0].mxu0
    %v480 = vadd.f32 %v407, %v479
    %481 = vmatprep.mubr.bf16.mxu0 0
    %482 = vmatmul.mubr.bf16.gmra.mrb[0].mxu0 %v341
    %v483 = vpop.f32.mrb[0].mxu0
    %v484 = vadd.f32 %v411, %v483
    %v485 = vpop.f32.mrb[0].mxu0
    %v486 = vadd.f32 %v413, %v485
    %v487 = vpop.f32.mrb[0].mxu0
    %v488 = vadd.f32 %v415, %v487
    %v489 = vpop.f32.mrb[0].mxu0
    %v490 = vadd.f32 %v417, %v489
    %491 = vmatprep.mubr.bf16.mxu0 0
    %492 = vmatmul.mubr.bf16.gmra.mrb[0].mxu0 %v344
    %v493 = vpop.f32.mrb[0].mxu0
    %v494 = vadd.f32 %v421, %v493
    %v495 = vpop.f32.mrb[0].mxu0
    %v496 = vadd.f32 %v423, %v495
    %v497 = vpop.f32.mrb[0].mxu0
    %v498 = vadd.f32 %v425, %v497
    %v499 = vpop.f32.mrb[0].mxu0
    %v500 = vadd.f32 %v427, %v499
    %501 = vdwg.mxu0
    %v502 = vmax.f32 %v464, 0.0
    %v503 = vmax.f32 %v466, 0.0
    %v504 = vmax.f32 %v468, 0.0
    %v505 = vmax.f32 %v470, 0.0
    %v506 = vmax.f32 %v474, 0.0
    %v507 = vmax.f32 %v476, 0.0
    %v508 = vmax.f32 %v478, 0.0
    %v509 = vmax.f32 %v480, 0.0
    %v510 = vmax.f32 %v484, 0.0
    %v511 = vmax.f32 %v486, 0.0
    %v512 = vmax.f32 %v488, 0.0
    %v513 = vmax.f32 %v490, 0.0
    %v514 = vmax.f32 %v494, 0.0
    %v515 = vmax.f32 %v496, 0.0
    %v516 = vmax.f32 %v498, 0.0
    %v517 = vmax.f32 %v500, 0.0
    %v518 = vld [vmem:[%s3] sm:$0x3]
    %v520 = vlaneseq
    %v521 = vshrl.u32 %v520, 7
    %v522 = vsub.s32 0, %v521
    %v523 = vrot.slane %v518, %v522
    %v524 = vlaneseq
    %v525 = vshrl.u32 %v524, 7
    %v526 = vsub.s32 1, %v525
    %v527 = vrot.slane %v518, %v526
    %v530 = vmul.f32 %v502, %v523
    %v531 = vmul.f32 %v503, %v527
    %v532 = vmul.f32 %v504, %v523
    %v533 = vmul.f32 %v505, %v527
    %v534 = vmul.f32 %v506, %v523
    %v535 = vmul.f32 %v507, %v527
    %v536 = vmul.f32 %v508, %v523
    %v537 = vmul.f32 %v509, %v527
    %v538 = vmul.f32 %v510, %v523
    %v539 = vmul.f32 %v511, %v527
    %v540 = vmul.f32 %v512, %v523
    %v541 = vmul.f32 %v513, %v527
    %v542 = vmul.f32 %v514, %v523
    %v543 = vmul.f32 %v515, %v527
    %v544 = vmul.f32 %v516, %v523
    %v545 = vmul.f32 %v517, %v527
    %v546 = vadd.f32 %v530, %v531
    %547 = vadd.xlane.f32.xlu0 %v546
    %v548 = vpop.xlane.xlu0 %547
    %v549 = vadd.f32 %v532, %v533
    %550 = vadd.xlane.f32.xlu0 %v549
    %v551 = vpop.xlane.xlu0 %550
    %v552 = vadd.f32 %v534, %v535
    %553 = vadd.xlane.f32.xlu0 %v552
    %v554 = vpop.xlane.xlu0 %553
    %v555 = vadd.f32 %v536, %v537
    %556 = vadd.xlane.f32.xlu0 %v555
    %v557 = vpop.xlane.xlu0 %556
    %v558 = vadd.f32 %v538, %v539
    %559 = vadd.xlane.f32.xlu0 %v558
    %v560 = vpop.xlane.xlu0 %559
    %v561 = vadd.f32 %v540, %v541
    %562 = vadd.xlane.f32.xlu0 %v561
    %v563 = vpop.xlane.xlu0 %562
    %v564 = vadd.f32 %v542, %v543
    %565 = vadd.xlane.f32.xlu0 %v564
    %v566 = vpop.xlane.xlu0 %565
    %v567 = vadd.f32 %v544, %v545
    %568 = vadd.xlane.f32.xlu0 %v567
    %v569 = vpop.xlane.xlu0 %568
    %s570 = sld [smem:[#allocation2]]
    %v571 = vstv %s570
    %v572 = vadd.f32 %v548, %v571
    %v573 = vadd.f32 %v551, %v571
    %v574 = vadd.f32 %v554, %v571
    %v575 = vadd.f32 %v557, %v571
    %v576 = vadd.f32 %v560, %v571
    %v577 = vadd.f32 %v563, %v571
    %v578 = vadd.f32 %v566, %v571
    %v579 = vadd.f32 %v569, %v571
    %v588 = vlaneseq
    %v589 = vand.u32 %v588, 127
    %v590 = vlaneseq
    %v591 = vshrl.u32 %v590, 7
    %v592 = vsub.s32 %v589, %v591
    %v593 = vrot.slane %v572, %v592
    %v594 = vadd.s32 %v589, 4294967288
    %v595 = vlaneseq
    %v596 = vshrl.u32 %v595, 7
    %v597 = vsub.s32 %v594, %v596
    %v598 = vrot.slane %v573, %v597
    %vm599 = vcmask 130112
    %v600 = vsel %vm599, %v598, %v593
    %v601 = vadd.s32 %v589, 4294967280
    %v602 = vlaneseq
    %v603 = vshrl.u32 %v602, 7
    %v604 = vsub.s32 %v601, %v603
    %v605 = vrot.slane %v574, %v604
    %vm606 = vcmask 195712
    %v607 = vsel %vm606, %v605, %v600
    %v608 = vadd.s32 %v589, 4294967272
    %v609 = vlaneseq
    %v610 = vshrl.u32 %v609, 7
    %v611 = vsub.s32 %v608, %v610
    %v612 = vrot.slane %v575, %v611
    %vm613 = vcmask 261312
    %v614 = vsel %vm613, %v612, %v607
    %v615 = vadd.s32 %v589, 4294967264
    %v616 = vlaneseq
    %v617 = vshrl.u32 %v616, 7
    %v618 = vsub.s32 %v615, %v617
    %v619 = vrot.slane %v576, %v618
    %vm620 = vcmask 326912
    %v621 = vsel %vm620, %v619, %v614
    %v622 = vadd.s32 %v589, 4294967256
    %v623 = vlaneseq
    %v624 = vshrl.u32 %v623, 7
    %v625 = vsub.s32 %v622, %v624
    %v626 = vrot.slane %v577, %v625
    %vm627 = vcmask 392512
    %v628 = vsel %vm627, %v626, %v621
    %v629 = vadd.s32 %v589, 4294967248
    %v630 = vlaneseq
    %v631 = vshrl.u32 %v630, 7
    %v632 = vsub.s32 %v629, %v631
    %v633 = vrot.slane %v578, %v632
    %vm634 = vcmask 458112
    %v635 = vsel %vm634, %v633, %v628
    %v636 = vadd.s32 %v589, 4294967240
    %v637 = vlaneseq
    %v638 = vshrl.u32 %v637, 7
    %v639 = vsub.s32 %v636, %v638
    %v640 = vrot.slane %v579, %v639
    %vm641 = vcmask 523712
    %v642 = vsel %vm641, %v640, %v635
    %vm644 = vcmask 516096
    %645 = vst.msk [vmem:[#allocation8] sm:$0x1] %vm644, %v642
    // Predicated region
    $region30: #{activity_nn_forward.1} parent=1 // pred_check
      _
    $region31: #{activity_nn_forward.1} parent=1 // pred_check_branch
      %647 = sbr.rel (0) target = $region33
    $region32: #{activity_nn_forward.1} parent=1 // pred_region
      %s649 = ssub.s32 16, 16
      %650 = vsyncadd [#allocation5], %s649
      %s652 = sshll.u32 [#allocation8], 4
      %s653 = int_to_ptr.vmem [resolvable:$true] %s652
      %655 = dma.vmem_to_hbm [thread:$0]  %s653, 16, %s5, [#allocation5]
    $region33: #{activity_nn_forward.1} parent=1 // pred_fallthru
      _
    // Predicated region
    $region34: #{activity_nn_forward.1} parent=1 // pred_check
      _
    $region35: #{activity_nn_forward.1} parent=1 // pred_check_branch
      %657 = sbr.rel (0) target = $region37
    $region36: #{activity_nn_forward.1} parent=1 // pred_region
      %658 = dma.done [#allocation5], 16
    $region37: #{activity_nn_forward.1} parent=1 // pred_fallthru
      _
    %659 = vsyncpa [#allocation4], 1
    %660 = vsyncpa [#allocation7], 1
    %661 = vsyncpa [#allocation5], 1

</llo_original>
